<compile_context>
chip_gen: v7x
topology: tpu7x:2x2x1
jax: 0.10.0
libtpu: 0.0.40
codegen_flags: <defaults>
</compile_context>

<pallas_src>
import functools

import jax
import jax.numpy as jnp
import numpy as np
from jax.experimental import pallas as pl
from jax.experimental.pallas import tpu as pltpu


def _round_up(x: int, m: int) -> int:
    return (x + m - 1) // m * m


def _fused_dft_matrices(seq_len: int, f_pad: int):
    """Fused (re/im stacked) ortho rfft / irfft matrices, zero-padded to f_pad.

    C: (2*f_pad, seq_len); rows [0:F] give Re(rfft(x)), rows [f_pad:f_pad+F] Im.
    D: (seq_len, 2*f_pad); irfft of a stacked re/im half-spectrum is D @ Y.
    (sin is zero at DC / Nyquist, so the imaginary parts there are ignored,
    matching torch/np irfft c2r semantics.)
    """
    N = seq_len
    F = N // 2 + 1
    n = np.arange(N)[None, :]            # (1, N)
    k = np.arange(F)[:, None]            # (F, 1)
    ang = 2.0 * np.pi * k * n / N        # (F, N)
    scale = 1.0 / np.sqrt(N)
    Cr = np.cos(ang) * scale             # (F, N)
    Ci = -np.sin(ang) * scale            # (F, N)
    c = np.full((F,), 2.0)
    c[0] = 1.0
    if N % 2 == 0:
        c[-1] = 1.0
    Dr = (np.cos(ang) * c[:, None]).T * scale    # (N, F)
    Di = (-np.sin(ang) * c[:, None]).T * scale   # (N, F)

    C = np.zeros((2 * f_pad, N), np.float32)
    C[:F] = Cr
    C[f_pad:f_pad + F] = Ci
    D = np.zeros((N, 2 * f_pad), np.float32)
    D[:, :F] = Dr
    D[:, f_pad:f_pad + F] = Di
    return jnp.asarray(C), jnp.asarray(D)


def _has_two_tensorcores() -> bool:
    """Heuristic: does the parallel grid axis get sharded across 2 TCs?"""
    try:
        kind = jax.devices()[0].device_kind.lower()
    except Exception:  # CPU interpret / unknown backend
        return False
    return any(tag in kind for tag in ("v4", "v5p", "7"))


def _pick_block_batch(batch: int, hidden: int, seq: int, *, two_tc: bool) -> int:
    """Pick the batch tile packed onto the lane axis.

    Prefers BT*H a multiple of 128 (unmasked stores), then the widest tile.
    Only enforces >= 2 grid steps when the chip actually has 2 TensorCores.
    """
    if hidden % 128 == 0:
        return 1                       # already lane-dense; skip packing.
    candidates = []
    for bt in range(1, batch + 1):
        if batch % bt:
            continue
        lanes = bt * hidden
        if lanes > 1024:               # lane cap (LN no longer scales ~BTH^2)
            continue
        if seq * lanes * 4 * 4 > (8 << 20):   # x+out tiles, double-buffered
            continue
        if two_tc and bt != 1 and batch // bt < 2:
            continue                   # keep both TensorCores busy
        candidates.append(bt)
    if not candidates:
        return 1
    return max(candidates, key=lambda bt: (bt * hidden % 128 == 0, bt * hidden))


def _filter_layer_kernel(x_ref, c_ref, d_ref, wa_ref, wb_ref, red_ref,
                         bcast_ref, gamma_ref, beta_ref, o_ref, *, f_pad):
    # x_ref: (1, S, BT*H) lane-dense f32 tile (BT batch elements on lanes).
    x = x_ref[0].astype(jnp.float32)                       # (S, BTH)

    # rfft along seq: ONE fused (re/im stacked) MXU matmul; cast at the matmul
    # only so the residual/LN path keeps the f32 input.
    xf = jnp.dot(c_ref[...], x.astype(c_ref.dtype),
                 preferred_element_type=jnp.float32)       # (2Fp, BTH)

    # Complex multiply by the learnable per-(freq, hidden) weight.  The re/im
    # swap is a sublane roll on the XLU (no slice/concat materialization):
    #   yf[:Fp]  = xr*wre - xi*wim ; yf[Fp:] = xi*wre + xr*wim
    yf = xf * wa_ref[...] + pltpu.roll(xf, shift=f_pad, axis=0) * wb_ref[...]

    # irfft back to the seq domain: ONE fused MXU matmul.
    y = jnp.dot(d_ref[...], yf.astype(d_ref.dtype),
                preferred_element_type=jnp.float32)        # (S, BTH)

    # dropout (identity at inference) + residual (f32) + LayerNorm over hidden.
    z = y + x                                              # (S, BTH) f32
    s = z.shape[0]
    # Lane-packed LN reduction: block reduce (BTH -> BT) then broadcast back
    # (BT -> BTH).  [z ; z*z] stacked on the sublane axis => one reduce matmul
    # gives both E[z] and E[z^2].  ~4*S*BTH*BT MACs (vs 2*S*BTH^2 before).
    zs = jnp.concatenate([z, z * z], axis=0)                               # (2S, BTH)
    sums = jnp.dot(zs, red_ref[...], preferred_element_type=jnp.float32)   # (2S, BT)
    means = jnp.dot(sums, bcast_ref[...],
                    preferred_element_type=jnp.float32)                    # (2S, BTH)
    mz = means[:s]
    var = means[s:] - mz * mz                              # single-pass variance (f32)
    inv = jax.lax.rsqrt(var + 1e-12)                       # EUP; eps matches nn.LayerNorm(eps=1e-12)
    ln = (z - mz) * inv * gamma_ref[...] + beta_ref[...]
    o_ref[0] = ln.astype(o_ref.dtype)


@functools.partial(jax.jit, static_argnames=("block_batch", "compute_dtype"))
def filter_layer(x, complex_weight, gamma, beta, *, block_batch=None,
                 compute_dtype=jnp.bfloat16):
    """x: (B, S, H) f32; complex_weight: (1, S//2+1, H, 2) f32.

    compute_dtype only affects the DFT matmul operands (C, D, and the cast of
    the rfft/irfft inputs); elementwise, residual, and LayerNorm math is f32.
    """
    B, S, H = x.shape
    F = S // 2 + 1
    Fp = _round_up(F, 8)
    BT = (block_batch if block_batch is not None
          else _pick_block_batch(B, H, S, two_tc=_has_two_tensorcores()))
    assert B % BT == 0, (B, BT)
    G = B // BT
    BTH = BT * H

    C, D = _fused_dft_matrices(S, Fp)
    C = C.astype(compute_dtype)                    # bf16 by default (MXU-native)
    D = D.astype(compute_dtype)

    # Weights: (F, H) -> pad to (Fp, H) -> stack for the roll trick
    #   Wa = [wre ; wre],  Wb = [-wim ; wim]   (both (2Fp, H), kept f32)
    # then tile across BT lane blocks (bt-major, h-minor) to match x packing.
    wre = jnp.zeros((Fp, H), jnp.float32).at[:F].set(complex_weight[0, :, :, 0])
    wim = jnp.zeros((Fp, H), jnp.float32).at[:F].set(complex_weight[0, :, :, 1])
    wa_t = jnp.tile(jnp.concatenate([wre, wre], axis=0), (1, BT))    # (2Fp, BTH)
    wb_t = jnp.tile(jnp.concatenate([-wim, wim], axis=0), (1, BT))   # (2Fp, BTH)

    gamma_t = jnp.tile(gamma.reshape(1, H).astype(jnp.float32), (1, BT))  # (1, BTH)
    beta_t = jnp.tile(beta.reshape(1, H).astype(jnp.float32), (1, BT))    # (1, BTH)

    # Small reduce / broadcast matrices for the lane-packed LayerNorm (f32):
    #   red:   (BTH, BT)  block column of 1/H      (per-(seq,batch) mean)
    #   bcast: (BT, BTH)  block row of ones        (broadcast back to H lanes)
    red = jnp.asarray(np.kron(np.eye(BT, dtype=np.float32),
                              np.full((H, 1), 1.0 / H, np.float32)))
    bcast = jnp.asarray(np.kron(np.eye(BT, dtype=np.float32),
                                np.ones((1, H), np.float32)))

    # Pack BT batch elements onto the lane axis: (B, S, H) -> (G, S, BT*H).
    # x stays f32 (cast to compute_dtype happens inside the kernel, matmul only).
    if BT == 1:
        xp = x
    else:
        # TODO(synk): fuse this pack (and the unpack below) into adjacent ops
        # in the surrounding model; it is pure HBM traffic.
        xp = x.reshape(G, BT, S, H).transpose(0, 2, 1, 3).reshape(G, S, BTH)

    def const(arr):
        return pl.BlockSpec(arr.shape, lambda g, _nd=arr.ndim: (0,) * _nd)

    kernel = functools.partial(_filter_layer_kernel, f_pad=Fp)
    out = pl.pallas_call(
        kernel,
        out_shape=jax.ShapeDtypeStruct((G, S, BTH), x.dtype),
        grid=(G,),
        in_specs=[
            pl.BlockSpec((1, S, BTH), lambda g: (g, 0, 0)),   # x (lane-packed)
            const(C),        # fused rfft matrix   (2Fp, S)
            const(D),        # fused irfft matrix  (S, 2Fp)
            const(wa_t),     # (2Fp, BTH)
            const(wb_t),     # (2Fp, BTH)
            const(red),      # (BTH, BT)
            const(bcast),    # (BT, BTH)
            const(gamma_t),  # (1, BTH)
            const(beta_t),   # (1, BTH)
        ],
        out_specs=pl.BlockSpec((1, S, BTH), lambda g: (g, 0, 0)),
        compiler_params=pltpu.CompilerParams(
            dimension_semantics=("parallel",)),
    )(xp, C, D, wa_t, wb_t, red, bcast, gamma_t, beta_t)

    if BT == 1:
        return out
    # Unpack back to (B, S, H).
    return out.reshape(G, S, BT, H).transpose(0, 2, 1, 3).reshape(B, S, H)


if __name__ == "__main__":
    # Module config: d_model=32, seq_len=16 (module default), batch=8.
    d_model, seq_len, batch = 32, 16, 8

    key = jax.random.PRNGKey(0)
    k_w, k_x = jax.random.split(key)

    # Deterministic parameter init (mirrors torch.randn(...) * init_ratio and
    # nn.LayerNorm defaults gamma=1, beta=0).
    complex_weight = jax.random.normal(
        k_w, (1, seq_len // 2 + 1, d_model, 2), dtype=jnp.float32)
    gamma = jnp.ones((d_model,), jnp.float32)
    beta = jnp.zeros((d_model,), jnp.float32)

    x = jax.random.normal(k_x, (batch, seq_len, d_model), dtype=jnp.float32)

    # Pure-JAX reference (rfft/irfft + residual + layernorm), all f32.
    w = complex_weight[..., 0] + 1j * complex_weight[..., 1]       # (1, F, H)
    xf = jnp.fft.rfft(x, axis=1, norm="ortho") * w
    y = jnp.fft.irfft(xf, n=seq_len, axis=1, norm="ortho")
    z = y + x
    mean = z.mean(-1, keepdims=True)
    var = ((z - mean) ** 2).mean(-1, keepdims=True)
    ref = (z - mean) / jnp.sqrt(var + 1e-12) * gamma + beta

    # 1) f32 DFT path: tight check (proves kernel math / LN restructure).
    out_f32 = filter_layer(x, complex_weight, gamma, beta,
                           compute_dtype=jnp.float32)
    jax.block_until_ready(out_f32)
    np.testing.assert_allclose(np.asarray(out_f32), np.asarray(ref),
                               rtol=1e-3, atol=1e-3)

    # 2) default bf16 DFT-matmul path: looser check (bf16 MXU operands only;
    #    residual + LayerNorm stay f32).
    out = filter_layer(x, complex_weight, gamma, beta)
    jax.block_until_ready(out)
    np.testing.assert_allclose(np.asarray(out), np.asarray(ref),
                               rtol=5e-2, atol=5e-2)

    print("KERNEL_OK")
</pallas_src>

<mosaic_0001>
module attributes {stable_mosaic.version = 11 : i64} {
  func.func @_filter_layer_kernel(%arg0: i32, %arg1: memref<1x16x256xf32, #tpu.memory_space<vmem>>, %arg2: memref<32x16xf32, #tpu.memory_space<vmem>>, %arg3: memref<16x32xf32, #tpu.memory_space<vmem>>, %arg4: memref<32x256xf32, #tpu.memory_space<vmem>>, %arg5: memref<32x256xf32, #tpu.memory_space<vmem>>, %arg6: memref<256x8xf32, #tpu.memory_space<vmem>>, %arg7: memref<8x256xf32, #tpu.memory_space<vmem>>, %arg8: memref<1x256xf32, #tpu.memory_space<vmem>>, %arg9: memref<1x256xf32, #tpu.memory_space<vmem>>, %arg10: memref<1x16x256xf32, #tpu.memory_space<vmem>>) attributes {dimension_semantics = [#tpu.dimension_semantics<parallel>], iteration_bounds = array<i64: 1>, scalar_prefetch = 0 : i64, scratch_operands = 0 : i64, tpu.core_type = #tpu.core_type<tc>, window_params = [{transform_indices = @transform_0, window_bounds = array<i64: 1, 16, 256>}, {pipeline_mode = #tpu.pipeline_mode<synchronous>, transform_indices = @transform_1, window_bounds = array<i64: 32, 16>}, {pipeline_mode = #tpu.pipeline_mode<synchronous>, transform_indices = @transform_2, window_bounds = array<i64: 16, 32>}, {pipeline_mode = #tpu.pipeline_mode<synchronous>, transform_indices = @transform_3, window_bounds = array<i64: 32, 256>}, {pipeline_mode = #tpu.pipeline_mode<synchronous>, transform_indices = @transform_4, window_bounds = array<i64: 32, 256>}, {pipeline_mode = #tpu.pipeline_mode<synchronous>, transform_indices = @transform_5, window_bounds = array<i64: 256, 8>}, {pipeline_mode = #tpu.pipeline_mode<synchronous>, transform_indices = @transform_6, window_bounds = array<i64: 8, 256>}, {pipeline_mode = #tpu.pipeline_mode<synchronous>, transform_indices = @transform_7, window_bounds = array<i64: 1, 256>}, {pipeline_mode = #tpu.pipeline_mode<synchronous>, transform_indices = @transform_8, window_bounds = array<i64: 1, 256>}, {transform_indices = @transform_9, window_bounds = array<i64: 1, 16, 256>}]} {
    %c0 = arith.constant 0 : index
    %c0_0 = arith.constant 0 : index
    %c0_1 = arith.constant 0 : index
    %0 = vector.load %arg1[%c0, %c0_0, %c0_1] : memref<1x16x256xf32, #tpu.memory_space<vmem>>, vector<1x16x256xf32>
    %1 = vector.shape_cast %0 : vector<1x16x256xf32> to vector<16x256xf32>
    %c0_2 = arith.constant 0 : index
    %c0_3 = arith.constant 0 : index
    %2 = vector.load %arg2[%c0_2, %c0_3] : memref<32x16xf32, #tpu.memory_space<vmem>>, vector<32x16xf32>
    %cst = arith.constant dense<0.000000e+00> : vector<32x256xf32>
    %3 = tpu.matmul %2, %1, %cst {dimension_numbers = #tpu.dot_dimension_numbers<[1], [0], [0], [1], [0, 0, 1, 1], [], []>} : vector<32x16xf32>, vector<16x256xf32>, vector<32x256xf32> -> vector<32x256xf32>
    %c0_4 = arith.constant 0 : index
    %c0_5 = arith.constant 0 : index
    %4 = vector.load %arg4[%c0_4, %c0_5] : memref<32x256xf32, #tpu.memory_space<vmem>>, vector<32x256xf32>
    %5 = arith.mulf %3, %4 : vector<32x256xf32>
    %c16_i32 = arith.constant 16 : i32
    %6 = tpu.dynamic_rotate %3 by %c16_i32 dim 0 : vector<32x256xf32>, i32 -> vector<32x256xf32>
    %c0_6 = arith.constant 0 : index
    %c0_7 = arith.constant 0 : index
    %7 = vector.load %arg5[%c0_6, %c0_7] : memref<32x256xf32, #tpu.memory_space<vmem>>, vector<32x256xf32>
    %8 = arith.mulf %6, %7 : vector<32x256xf32>
    %9 = arith.addf %5, %8 : vector<32x256xf32>
    %c0_8 = arith.constant 0 : index
    %c0_9 = arith.constant 0 : index
    %10 = vector.load %arg3[%c0_8, %c0_9] : memref<16x32xf32, #tpu.memory_space<vmem>>, vector<16x32xf32>
    %cst_10 = arith.constant dense<0.000000e+00> : vector<16x256xf32>
    %11 = tpu.matmul %10, %9, %cst_10 {dimension_numbers = #tpu.dot_dimension_numbers<[1], [0], [0], [1], [0, 0, 1, 1], [], []>} : vector<16x32xf32>, vector<32x256xf32>, vector<16x256xf32> -> vector<16x256xf32>
    %12 = arith.addf %11, %1 : vector<16x256xf32>
    %13 = arith.mulf %12, %12 : vector<16x256xf32>
    %14 = tpu.concatenate %12, %13 in 0 : vector<16x256xf32>, vector<16x256xf32> -> vector<32x256xf32>
    %c0_11 = arith.constant 0 : index
    %c0_12 = arith.constant 0 : index
    %15 = vector.load %arg6[%c0_11, %c0_12] : memref<256x8xf32, #tpu.memory_space<vmem>>, vector<256x8xf32>
    %cst_13 = arith.constant dense<0.000000e+00> : vector<32x8xf32>
    %16 = tpu.matmul %14, %15, %cst_13 {dimension_numbers = #tpu.dot_dimension_numbers<[1], [0], [0], [1], [0, 0, 1, 1], [], []>} : vector<32x256xf32>, vector<256x8xf32>, vector<32x8xf32> -> vector<32x8xf32>
    %c0_14 = arith.constant 0 : index
    %c0_15 = arith.constant 0 : index
    %17 = vector.load %arg7[%c0_14, %c0_15] : memref<8x256xf32, #tpu.memory_space<vmem>>, vector<8x256xf32>
    %cst_16 = arith.constant dense<0.000000e+00> : vector<32x256xf32>
    %18 = tpu.matmul %16, %17, %cst_16 {dimension_numbers = #tpu.dot_dimension_numbers<[1], [0], [0], [1], [0, 0, 1, 1], [], []>} : vector<32x8xf32>, vector<8x256xf32>, vector<32x256xf32> -> vector<32x256xf32>
    %19 = vector.extract_strided_slice %18 {offsets = [0, 0], sizes = [16, 256], strides = [1, 1]} : vector<32x256xf32> to vector<16x256xf32>
    %20 = vector.extract_strided_slice %18 {offsets = [16, 0], sizes = [16, 256], strides = [1, 1]} : vector<32x256xf32> to vector<16x256xf32>
    %21 = arith.mulf %19, %19 : vector<16x256xf32>
    %22 = arith.subf %20, %21 : vector<16x256xf32>
    %cst_17 = arith.constant 9.99999996E-13 : f32
    %23 = vector.broadcast %cst_17 : f32 to vector<16x256xf32>
    %24 = arith.addf %22, %23 : vector<16x256xf32>
    %25 = math.rsqrt %24 : vector<16x256xf32>
    %26 = arith.subf %12, %19 : vector<16x256xf32>
    %27 = arith.mulf %26, %25 : vector<16x256xf32>
    %c0_18 = arith.constant 0 : index
    %c0_19 = arith.constant 0 : index
    %28 = vector.load %arg8[%c0_18, %c0_19] : memref<1x256xf32, #tpu.memory_space<vmem>>, vector<1x256xf32>
    %29 = vector.broadcast %28 : vector<1x256xf32> to vector<16x256xf32>
    %30 = arith.mulf %27, %29 : vector<16x256xf32>
    %c0_20 = arith.constant 0 : index
    %c0_21 = arith.constant 0 : index
    %31 = vector.load %arg9[%c0_20, %c0_21] : memref<1x256xf32, #tpu.memory_space<vmem>>, vector<1x256xf32>
    %32 = vector.broadcast %31 : vector<1x256xf32> to vector<16x256xf32>
    %33 = arith.addf %30, %32 : vector<16x256xf32>
    %c0_22 = arith.constant 0 : index
    %c0_23 = arith.constant 0 : index
    %c0_24 = arith.constant 0 : index
    %34 = vector.load %arg10[%c0_22, %c0_23, %c0_24] : memref<1x16x256xf32, #tpu.memory_space<vmem>>, vector<1x16x256xf32>
    %35 = vector.shape_cast %34 : vector<1x16x256xf32> to vector<16x256xf32>
    %36 = vector.shape_cast %33 : vector<16x256xf32> to vector<1x16x256xf32>
    tpu.vector_store %arg10[%c0_22, %c0_23, %c0_24], %36 {strides = array<i32>} : memref<1x16x256xf32, #tpu.memory_space<vmem>>, vector<1x16x256xf32>,
    return
  }
  func.func @transform_0(%arg0: i32) -> (i32, i32, i32) {
    %c0_i32 = arith.constant 0 : i32
    %c0_i32_0 = arith.constant 0 : i32
    %c0_i32_1 = arith.constant 0 : i32
    return %arg0, %c0_i32, %c0_i32_0 : i32, i32, i32
  }
  func.func @transform_1(%arg0: i32) -> (i32, i32) {
    %c0_i32 = arith.constant 0 : i32
    %c0_i32_0 = arith.constant 0 : i32
    %c0_i32_1 = arith.constant 0 : i32
    return %c0_i32, %c0_i32_0 : i32, i32
  }
  func.func @transform_2(%arg0: i32) -> (i32, i32) {
    %c0_i32 = arith.constant 0 : i32
    %c0_i32_0 = arith.constant 0 : i32
    %c0_i32_1 = arith.constant 0 : i32
    return %c0_i32, %c0_i32_0 : i32, i32
  }
  func.func @transform_3(%arg0: i32) -> (i32, i32) {
    %c0_i32 = arith.constant 0 : i32
    %c0_i32_0 = arith.constant 0 : i32
    %c0_i32_1 = arith.constant 0 : i32
    return %c0_i32, %c0_i32_0 : i32, i32
  }
  func.func @transform_4(%arg0: i32) -> (i32, i32) {
    %c0_i32 = arith.constant 0 : i32
    %c0_i32_0 = arith.constant 0 : i32
    %c0_i32_1 = arith.constant 0 : i32
    return %c0_i32, %c0_i32_0 : i32, i32
  }
  func.func @transform_5(%arg0: i32) -> (i32, i32) {
    %c0_i32 = arith.constant 0 : i32
    %c0_i32_0 = arith.constant 0 : i32
    %c0_i32_1 = arith.constant 0 : i32
    return %c0_i32, %c0_i32_0 : i32, i32
  }
  func.func @transform_6(%arg0: i32) -> (i32, i32) {
    %c0_i32 = arith.constant 0 : i32
    %c0_i32_0 = arith.constant 0 : i32
    %c0_i32_1 = arith.constant 0 : i32
    return %c0_i32, %c0_i32_0 : i32, i32
  }
  func.func @transform_7(%arg0: i32) -> (i32, i32) {
    %c0_i32 = arith.constant 0 : i32
    %c0_i32_0 = arith.constant 0 : i32
    %c0_i32_1 = arith.constant 0 : i32
    return %c0_i32, %c0_i32_0 : i32, i32
  }
  func.func @transform_8(%arg0: i32) -> (i32, i32) {
    %c0_i32 = arith.constant 0 : i32
    %c0_i32_0 = arith.constant 0 : i32
    %c0_i32_1 = arith.constant 0 : i32
    return %c0_i32, %c0_i32_0 : i32, i32
  }
  func.func @transform_9(%arg0: i32) -> (i32, i32, i32) {
    %c0_i32 = arith.constant 0 : i32
    %c0_i32_0 = arith.constant 0 : i32
    %c0_i32_1 = arith.constant 0 : i32
    return %arg0, %c0_i32, %c0_i32_0 : i32, i32, i32
  }
}

</mosaic_0001>

<llo_original>
// kernel: tile.27
$region0: #{tile.27}
  %s0 = inlined_call_operand.vmem [shape: f32[32,8,32], index: 0, kind: input, shape index: {}]
  %s1 = inlined_call_operand.vmem [shape: f32[32,256], index: 1, kind: output, shape index: {}]
  %v2 = vld [vmem:[%s0] ss:$4 sm:$0xff]
  %vm3 = vcmask 261120
  %4 = vst.msk [vmem:[%s1] ss:$8 sm:$0x3] %vm3, %v2
  %s5 = scalar_lea.vmem %s1, 4294967281
  %6 = vst.msk [vmem:[%s5] ss:$8 sm:$0xc] %vm3, %v2
  %s7 = scalar_lea.vmem %s1, 4294967266
  %8 = vst.msk [vmem:[%s7] ss:$8 sm:$0x30] %vm3, %v2
  %s9 = scalar_lea.vmem %s1, 4294967251
  %10 = vst.msk [vmem:[%s9] ss:$8 sm:$0xc0] %vm3, %v2
  %s11 = scalar_lea.vmem %s0, 32
  %v12 = vld [vmem:[%s11] ss:$4 sm:$0xff]
  %vm13 = vcmask 261120
  %s14 = scalar_lea.vmem %s1, 4
  %15 = vst.msk [vmem:[%s14] ss:$8 sm:$0x3] %vm13, %v12
  %s16 = scalar_lea.vmem %s1, 4294967285
  %17 = vst.msk [vmem:[%s16] ss:$8 sm:$0xc] %vm13, %v12
  %s18 = scalar_lea.vmem %s1, 4294967270
  %19 = vst.msk [vmem:[%s18] ss:$8 sm:$0x30] %vm13, %v12
  %s20 = scalar_lea.vmem %s1, 4294967255
  %21 = vst.msk [vmem:[%s20] ss:$8 sm:$0xc0] %vm13, %v12
  %s22 = scalar_lea.vmem %s0, 64
  %v23 = vld [vmem:[%s22] ss:$4 sm:$0xff]
  %vm24 = vcmask 261120
  %s25 = scalar_lea.vmem %s1, 16
  %26 = vst.msk [vmem:[%s25] ss:$8 sm:$0x3] %vm24, %v23
  %s27 = scalar_lea.vmem %s1, 1
  %28 = vst.msk [vmem:[%s27] ss:$8 sm:$0xc] %vm24, %v23
  %s29 = scalar_lea.vmem %s1, 4294967282
  %30 = vst.msk [vmem:[%s29] ss:$8 sm:$0x30] %vm24, %v23
  %s31 = scalar_lea.vmem %s1, 4294967267
  %32 = vst.msk [vmem:[%s31] ss:$8 sm:$0xc0] %vm24, %v23
  %s33 = scalar_lea.vmem %s0, 96
  %v34 = vld [vmem:[%s33] ss:$4 sm:$0xff]
  %vm35 = vcmask 261120
  %s36 = scalar_lea.vmem %s1, 20
  %37 = vst.msk [vmem:[%s36] ss:$8 sm:$0x3] %vm35, %v34
  %s38 = scalar_lea.vmem %s1, 5
  %39 = vst.msk [vmem:[%s38] ss:$8 sm:$0xc] %vm35, %v34
  %s40 = scalar_lea.vmem %s1, 4294967286
  %41 = vst.msk [vmem:[%s40] ss:$8 sm:$0x30] %vm35, %v34
  %s42 = scalar_lea.vmem %s1, 4294967271
  %43 = vst.msk [vmem:[%s42] ss:$8 sm:$0xc0] %vm35, %v34
  %s44 = scalar_lea.vmem %s0, 128
  %v45 = vld [vmem:[%s44] ss:$4 sm:$0xff]
  %vm46 = vcmask 261120
  %s47 = scalar_lea.vmem %s1, 32
  %48 = vst.msk [vmem:[%s47] ss:$8 sm:$0x3] %vm46, %v45
  %s49 = scalar_lea.vmem %s1, 17
  %50 = vst.msk [vmem:[%s49] ss:$8 sm:$0xc] %vm46, %v45
  %s51 = scalar_lea.vmem %s1, 2
  %52 = vst.msk [vmem:[%s51] ss:$8 sm:$0x30] %vm46, %v45
  %s53 = scalar_lea.vmem %s1, 4294967283
  %54 = vst.msk [vmem:[%s53] ss:$8 sm:$0xc0] %vm46, %v45
  %s55 = scalar_lea.vmem %s0, 160
  %v56 = vld [vmem:[%s55] ss:$4 sm:$0xff]
  %vm57 = vcmask 261120
  %s58 = scalar_lea.vmem %s1, 36
  %59 = vst.msk [vmem:[%s58] ss:$8 sm:$0x3] %vm57, %v56
  %s60 = scalar_lea.vmem %s1, 21
  %61 = vst.msk [vmem:[%s60] ss:$8 sm:$0xc] %vm57, %v56
  %s62 = scalar_lea.vmem %s1, 6
  %63 = vst.msk [vmem:[%s62] ss:$8 sm:$0x30] %vm57, %v56
  %s64 = scalar_lea.vmem %s1, 4294967287
  %65 = vst.msk [vmem:[%s64] ss:$8 sm:$0xc0] %vm57, %v56
  %s66 = scalar_lea.vmem %s0, 192
  %v67 = vld [vmem:[%s66] ss:$4 sm:$0xff]
  %vm68 = vcmask 261120
  %s69 = scalar_lea.vmem %s1, 48
  %70 = vst.msk [vmem:[%s69] ss:$8 sm:$0x3] %vm68, %v67
  %s71 = scalar_lea.vmem %s1, 33
  %72 = vst.msk [vmem:[%s71] ss:$8 sm:$0xc] %vm68, %v67
  %s73 = scalar_lea.vmem %s1, 18
  %74 = vst.msk [vmem:[%s73] ss:$8 sm:$0x30] %vm68, %v67
  %s75 = scalar_lea.vmem %s1, 3
  %76 = vst.msk [vmem:[%s75] ss:$8 sm:$0xc0] %vm68, %v67
  %s77 = scalar_lea.vmem %s0, 224
  %v78 = vld [vmem:[%s77] ss:$4 sm:$0xff]
  %vm79 = vcmask 261120
  %s80 = scalar_lea.vmem %s1, 52
  %81 = vst.msk [vmem:[%s80] ss:$8 sm:$0x3] %vm79, %v78
  %s82 = scalar_lea.vmem %s1, 37
  %83 = vst.msk [vmem:[%s82] ss:$8 sm:$0xc] %vm79, %v78
  %s84 = scalar_lea.vmem %s1, 22
  %85 = vst.msk [vmem:[%s84] ss:$8 sm:$0x30] %vm79, %v78
  %s86 = scalar_lea.vmem %s1, 7
  %87 = vst.msk [vmem:[%s86] ss:$8 sm:$0xc0] %vm79, %v78
  %s88 = scalar_lea.vmem %s0, 3
  %v89 = vld [vmem:[%s88] ss:$8 sm:$0xf]
  %s90 = scalar_lea.vmem %s0, 3
  %v91 = vld [vmem:[%s90] ss:$8 sm:$0xf0]
  %vm92 = vcmask 1047556
  %v93 = vsel %vm92, %v91, %v89
  %94 = vrot.lane.b32.xlu0 %v93, 96
  %v95 = vpop.permute.xlu0 %94
  %vm96 = vcmask 1048320
  %97 = vst.msk [vmem:[%s1] sm:$0xff] %vm96, %v95
  %s98 = scalar_lea.vmem %s0, 131
  %v99 = vld [vmem:[%s98] ss:$8 sm:$0xf]
  %s100 = scalar_lea.vmem %s0, 131
  %v101 = vld [vmem:[%s100] ss:$8 sm:$0xf0]
  %vm102 = vcmask 1047556
  %v103 = vsel %vm102, %v101, %v99
  %104 = vrot.lane.b32.xlu0 %v103, 96
  %v105 = vpop.permute.xlu0 %104
  %vm106 = vcmask 1048320
  %s107 = scalar_lea.vmem %s1, 32
  %108 = vst.msk [vmem:[%s107] sm:$0xff] %vm106, %v105
  %s109 = scalar_lea.vmem %s0, 7
  %v110 = vld [vmem:[%s109] ss:$8 sm:$0xf]
  %s111 = scalar_lea.vmem %s0, 7
  %v112 = vld [vmem:[%s111] ss:$8 sm:$0xf0]
  %vm113 = vcmask 1047556
  %v114 = vsel %vm113, %v112, %v110
  %115 = vrot.lane.b32.xlu0 %v114, 96
  %v116 = vpop.permute.xlu0 %115
  %vm117 = vcmask 1048320
  %s118 = scalar_lea.vmem %s1, 8
  %119 = vst.msk [vmem:[%s118] sm:$0xff] %vm117, %v116
  %s120 = scalar_lea.vmem %s0, 135
  %v121 = vld [vmem:[%s120] ss:$8 sm:$0xf]
  %s122 = scalar_lea.vmem %s0, 135
  %v123 = vld [vmem:[%s122] ss:$8 sm:$0xf0]
  %vm124 = vcmask 1047556
  %v125 = vsel %vm124, %v123, %v121
  %126 = vrot.lane.b32.xlu0 %v125, 96
  %v127 = vpop.permute.xlu0 %126
  %vm128 = vcmask 1048320
  %s129 = scalar_lea.vmem %s1, 40
  %130 = vst.msk [vmem:[%s129] sm:$0xff] %vm128, %v127
  %s131 = scalar_lea.vmem %s0, 67
  %v132 = vld [vmem:[%s131] ss:$8 sm:$0xf]
  %s133 = scalar_lea.vmem %s0, 67
  %v134 = vld [vmem:[%s133] ss:$8 sm:$0xf0]
  %vm135 = vcmask 1047556
  %v136 = vsel %vm135, %v134, %v132
  %137 = vrot.lane.b32.xlu0 %v136, 96
  %v138 = vpop.permute.xlu0 %137
  %vm139 = vcmask 1048320
  %s140 = scalar_lea.vmem %s1, 16
  %141 = vst.msk [vmem:[%s140] sm:$0xff] %vm139, %v138
  %s142 = scalar_lea.vmem %s0, 195
  %v143 = vld [vmem:[%s142] ss:$8 sm:$0xf]
  %s144 = scalar_lea.vmem %s0, 195
  %v145 = vld [vmem:[%s144] ss:$8 sm:$0xf0]
  %vm146 = vcmask 1047556
  %v147 = vsel %vm146, %v145, %v143
  %148 = vrot.lane.b32.xlu0 %v147, 96
  %v149 = vpop.permute.xlu0 %148
  %vm150 = vcmask 1048320
  %s151 = scalar_lea.vmem %s1, 48
  %152 = vst.msk [vmem:[%s151] sm:$0xff] %vm150, %v149
  %s153 = scalar_lea.vmem %s0, 71
  %v154 = vld [vmem:[%s153] ss:$8 sm:$0xf]
  %s155 = scalar_lea.vmem %s0, 71
  %v156 = vld [vmem:[%s155] ss:$8 sm:$0xf0]
  %vm157 = vcmask 1047556
  %v158 = vsel %vm157, %v156, %v154
  %159 = vrot.lane.b32.xlu0 %v158, 96
  %v160 = vpop.permute.xlu0 %159
  %vm161 = vcmask 1048320
  %s162 = scalar_lea.vmem %s1, 24
  %163 = vst.msk [vmem:[%s162] sm:$0xff] %vm161, %v160
  %s164 = scalar_lea.vmem %s0, 199
  %v165 = vld [vmem:[%s164] ss:$8 sm:$0xf]
  %s166 = scalar_lea.vmem %s0, 199
  %v167 = vld [vmem:[%s166] ss:$8 sm:$0xf0]
  %vm168 = vcmask 1047556
  %v169 = vsel %vm168, %v167, %v165
  %170 = vrot.lane.b32.xlu0 %v169, 96
  %v171 = vpop.permute.xlu0 %170
  %vm172 = vcmask 1048320
  %s173 = scalar_lea.vmem %s1, 56
  %174 = vst.msk [vmem:[%s173] sm:$0xff] %vm172, %v171
  %s175 = scalar_lea.vmem %s0, 2
  %v176 = vld [vmem:[%s175] ss:$8 sm:$0xf]
  %s177 = scalar_lea.vmem %s0, 2
  %v178 = vld [vmem:[%s177] ss:$8 sm:$0xf0]
  %vm179 = vcmask 1047556
  %v180 = vsel %vm179, %v178, %v176
  %181 = vrot.lane.b32.xlu0 %v180, 64
  %v182 = vpop.permute.xlu0 %181
  %vm183 = vcmask 785920
  %184 = vst.msk [vmem:[%s1] sm:$0xff] %vm183, %v182
  %s185 = scalar_lea.vmem %s0, 130
  %v186 = vld [vmem:[%s185] ss:$8 sm:$0xf]
  %s187 = scalar_lea.vmem %s0, 130
  %v188 = vld [vmem:[%s187] ss:$8 sm:$0xf0]
  %vm189 = vcmask 1047556
  %v190 = vsel %vm189, %v188, %v186
  %191 = vrot.lane.b32.xlu0 %v190, 64
  %v192 = vpop.permute.xlu0 %191
  %vm193 = vcmask 785920
  %s194 = scalar_lea.vmem %s1, 32
  %195 = vst.msk [vmem:[%s194] sm:$0xff] %vm193, %v192
  %s196 = scalar_lea.vmem %s0, 6
  %v197 = vld [vmem:[%s196] ss:$8 sm:$0xf]
  %s198 = scalar_lea.vmem %s0, 6
  %v199 = vld [vmem:[%s198] ss:$8 sm:$0xf0]
  %vm200 = vcmask 1047556
  %v201 = vsel %vm200, %v199, %v197
  %202 = vrot.lane.b32.xlu0 %v201, 64
  %v203 = vpop.permute.xlu0 %202
  %vm204 = vcmask 785920
  %s205 = scalar_lea.vmem %s1, 8
  %206 = vst.msk [vmem:[%s205] sm:$0xff] %vm204, %v203
  %s207 = scalar_lea.vmem %s0, 134
  %v208 = vld [vmem:[%s207] ss:$8 sm:$0xf]
  %s209 = scalar_lea.vmem %s0, 134
  %v210 = vld [vmem:[%s209] ss:$8 sm:$0xf0]
  %vm211 = vcmask 1047556
  %v212 = vsel %vm211, %v210, %v208
  %213 = vrot.lane.b32.xlu0 %v212, 64
  %v214 = vpop.permute.xlu0 %213
  %vm215 = vcmask 785920
  %s216 = scalar_lea.vmem %s1, 40
  %217 = vst.msk [vmem:[%s216] sm:$0xff] %vm215, %v214
  %s218 = scalar_lea.vmem %s0, 66
  %v219 = vld [vmem:[%s218] ss:$8 sm:$0xf]
  %s220 = scalar_lea.vmem %s0, 66
  %v221 = vld [vmem:[%s220] ss:$8 sm:$0xf0]
  %vm222 = vcmask 1047556
  %v223 = vsel %vm222, %v221, %v219
  %224 = vrot.lane.b32.xlu0 %v223, 64
  %v225 = vpop.permute.xlu0 %224
  %vm226 = vcmask 785920
  %s227 = scalar_lea.vmem %s1, 16
  %228 = vst.msk [vmem:[%s227] sm:$0xff] %vm226, %v225
  %s229 = scalar_lea.vmem %s0, 194
  %v230 = vld [vmem:[%s229] ss:$8 sm:$0xf]
  %s231 = scalar_lea.vmem %s0, 194
  %v232 = vld [vmem:[%s231] ss:$8 sm:$0xf0]
  %vm233 = vcmask 1047556
  %v234 = vsel %vm233, %v232, %v230
  %235 = vrot.lane.b32.xlu0 %v234, 64
  %v236 = vpop.permute.xlu0 %235
  %vm237 = vcmask 785920
  %s238 = scalar_lea.vmem %s1, 48
  %239 = vst.msk [vmem:[%s238] sm:$0xff] %vm237, %v236
  %s240 = scalar_lea.vmem %s0, 70
  %v241 = vld [vmem:[%s240] ss:$8 sm:$0xf]
  %s242 = scalar_lea.vmem %s0, 70
  %v243 = vld [vmem:[%s242] ss:$8 sm:$0xf0]
  %vm244 = vcmask 1047556
  %v245 = vsel %vm244, %v243, %v241
  %246 = vrot.lane.b32.xlu0 %v245, 64
  %v247 = vpop.permute.xlu0 %246
  %vm248 = vcmask 785920
  %s249 = scalar_lea.vmem %s1, 24
  %250 = vst.msk [vmem:[%s249] sm:$0xff] %vm248, %v247
  %s251 = scalar_lea.vmem %s0, 198
  %v252 = vld [vmem:[%s251] ss:$8 sm:$0xf]
  %s253 = scalar_lea.vmem %s0, 198
  %v254 = vld [vmem:[%s253] ss:$8 sm:$0xf0]
  %vm255 = vcmask 1047556
  %v256 = vsel %vm255, %v254, %v252
  %257 = vrot.lane.b32.xlu0 %v256, 64
  %v258 = vpop.permute.xlu0 %257
  %vm259 = vcmask 785920
  %s260 = scalar_lea.vmem %s1, 56
  %261 = vst.msk [vmem:[%s260] sm:$0xff] %vm259, %v258
  %s262 = scalar_lea.vmem %s0, 1
  %v263 = vld [vmem:[%s262] ss:$8 sm:$0xf]
  %s264 = scalar_lea.vmem %s0, 1
  %v265 = vld [vmem:[%s264] ss:$8 sm:$0xf0]
  %vm266 = vcmask 1047556
  %v267 = vsel %vm266, %v265, %v263
  %268 = vrot.lane.b32.xlu0 %v267, 32
  %v269 = vpop.permute.xlu0 %268
  %vm270 = vcmask 523520
  %271 = vst.msk [vmem:[%s1] sm:$0xff] %vm270, %v269
  %s272 = scalar_lea.vmem %s0, 129
  %v273 = vld [vmem:[%s272] ss:$8 sm:$0xf]
  %s274 = scalar_lea.vmem %s0, 129
  %v275 = vld [vmem:[%s274] ss:$8 sm:$0xf0]
  %vm276 = vcmask 1047556
  %v277 = vsel %vm276, %v275, %v273
  %278 = vrot.lane.b32.xlu0 %v277, 32
  %v279 = vpop.permute.xlu0 %278
  %vm280 = vcmask 523520
  %s281 = scalar_lea.vmem %s1, 32
  %282 = vst.msk [vmem:[%s281] sm:$0xff] %vm280, %v279
  %s283 = scalar_lea.vmem %s0, 5
  %v284 = vld [vmem:[%s283] ss:$8 sm:$0xf]
  %s285 = scalar_lea.vmem %s0, 5
  %v286 = vld [vmem:[%s285] ss:$8 sm:$0xf0]
  %vm287 = vcmask 1047556
  %v288 = vsel %vm287, %v286, %v284
  %289 = vrot.lane.b32.xlu0 %v288, 32
  %v290 = vpop.permute.xlu0 %289
  %vm291 = vcmask 523520
  %s292 = scalar_lea.vmem %s1, 8
  %293 = vst.msk [vmem:[%s292] sm:$0xff] %vm291, %v290
  %s294 = scalar_lea.vmem %s0, 133
  %v295 = vld [vmem:[%s294] ss:$8 sm:$0xf]
  %s296 = scalar_lea.vmem %s0, 133
  %v297 = vld [vmem:[%s296] ss:$8 sm:$0xf0]
  %vm298 = vcmask 1047556
  %v299 = vsel %vm298, %v297, %v295
  %300 = vrot.lane.b32.xlu0 %v299, 32
  %v301 = vpop.permute.xlu0 %300
  %vm302 = vcmask 523520
  %s303 = scalar_lea.vmem %s1, 40
  %304 = vst.msk [vmem:[%s303] sm:$0xff] %vm302, %v301
  %s305 = scalar_lea.vmem %s0, 65
  %v306 = vld [vmem:[%s305] ss:$8 sm:$0xf]
  %s307 = scalar_lea.vmem %s0, 65
  %v308 = vld [vmem:[%s307] ss:$8 sm:$0xf0]
  %vm309 = vcmask 1047556
  %v310 = vsel %vm309, %v308, %v306
  %311 = vrot.lane.b32.xlu0 %v310, 32
  %v312 = vpop.permute.xlu0 %311
  %vm313 = vcmask 523520
  %s314 = scalar_lea.vmem %s1, 16
  %315 = vst.msk [vmem:[%s314] sm:$0xff] %vm313, %v312
  %s316 = scalar_lea.vmem %s0, 193
  %v317 = vld [vmem:[%s316] ss:$8 sm:$0xf]
  %s318 = scalar_lea.vmem %s0, 193
  %v319 = vld [vmem:[%s318] ss:$8 sm:$0xf0]
  %vm320 = vcmask 1047556
  %v321 = vsel %vm320, %v319, %v317
  %322 = vrot.lane.b32.xlu0 %v321, 32
  %v323 = vpop.permute.xlu0 %322
  %vm324 = vcmask 523520
  %s325 = scalar_lea.vmem %s1, 48
  %326 = vst.msk [vmem:[%s325] sm:$0xff] %vm324, %v323
  %s327 = scalar_lea.vmem %s0, 69
  %v328 = vld [vmem:[%s327] ss:$8 sm:$0xf]
  %s329 = scalar_lea.vmem %s0, 69
  %v330 = vld [vmem:[%s329] ss:$8 sm:$0xf0]
  %vm331 = vcmask 1047556
  %v332 = vsel %vm331, %v330, %v328
  %333 = vrot.lane.b32.xlu0 %v332, 32
  %v334 = vpop.permute.xlu0 %333
  %vm335 = vcmask 523520
  %s336 = scalar_lea.vmem %s1, 24
  %337 = vst.msk [vmem:[%s336] sm:$0xff] %vm335, %v334
  %s338 = scalar_lea.vmem %s0, 197
  %v339 = vld [vmem:[%s338] ss:$8 sm:$0xf]
  %s340 = scalar_lea.vmem %s0, 197
  %v341 = vld [vmem:[%s340] ss:$8 sm:$0xf0]
  %vm342 = vcmask 1047556
  %v343 = vsel %vm342, %v341, %v339
  %344 = vrot.lane.b32.xlu0 %v343, 32
  %v345 = vpop.permute.xlu0 %344
  %vm346 = vcmask 523520
  %s347 = scalar_lea.vmem %s1, 56
  %348 = vst.msk [vmem:[%s347] sm:$0xff] %vm346, %v345

// kernel: filter_layer.1
$region0: #{filter_layer.1}
  #allocation0 [shape = 'u32[]', space=smem, size = 0x4, offset = 0x4, fixed_abs, tag = 'smem constant byte address 0x4 - core index']
  #allocation1 [shape = 'u32[144,128]{1,0:T(1,128)}', space=vmem, size = 0x12000, scoped, tag = 'internal scratch']
  %s0 = inlined_call_operand.vmem [shape: f32[1,16,256], index: 0, kind: input, shape index: {}]
  %s1 = inlined_call_operand.vmem [shape: f32[32,16], index: 1, kind: input, shape index: {}]
  %s2 = inlined_call_operand.vmem [shape: f32[16,32], index: 2, kind: input, shape index: {}]
  %s3 = inlined_call_operand.vmem [shape: f32[32,256], index: 3, kind: input, shape index: {}]
  %s4 = inlined_call_operand.vmem [shape: f32[32,256], index: 4, kind: input, shape index: {}]
  %s5 = inlined_call_operand.vmem [shape: f32[256,8], index: 5, kind: input, shape index: {}]
  %s6 = inlined_call_operand.vmem [shape: f32[8,256], index: 6, kind: input, shape index: {}]
  %s7 = inlined_call_operand.vmem [shape: f32[1,256], index: 7, kind: input, shape index: {}]
  %s8 = inlined_call_operand.vmem [shape: f32[1,256], index: 8, kind: input, shape index: {}]
  %s9 = inlined_call_operand.vmem [shape: f32[1,16,256], index: 9, kind: output, shape index: {}]
  %s10 = sld [smem:[#allocation0]]
  $region46: #{filter_layer.1} parent=0
    _
  %s12 = ssub.s32 1, %s10
  %s13 = scalar_select 0, %s12, %s10
  // Predicated region
  $region2: #{filter_layer.1} parent=0 // pred_check
    _
  $region3: #{filter_layer.1} parent=0 // pred_check_branch
    %15 = sbr.rel (0) target = $region5
  $region4: #{filter_layer.1} parent=0 // pred_region
    _
  $region5: #{filter_layer.1} parent=0 // pred_fallthru
    _
  // Predicated region
  $region6: #{filter_layer.1} parent=0 // pred_check
    _
  $region7: #{filter_layer.1} parent=0 // pred_check_branch
    %17 = sbr.rel (0) target = $region9
  $region8: #{filter_layer.1} parent=0 // pred_region
    _
  $region9: #{filter_layer.1} parent=0 // pred_fallthru
    _
  // Predicated region
  $region10: #{filter_layer.1} parent=0 // pred_check
    _
  $region11: #{filter_layer.1} parent=0 // pred_check_branch
    %19 = sbr.rel (0) target = $region13
  $region12: #{filter_layer.1} parent=0 // pred_region
    _
  $region13: #{filter_layer.1} parent=0 // pred_fallthru
    _
  // Predicated region
  $region14: #{filter_layer.1} parent=0 // pred_check
    _
  $region15: #{filter_layer.1} parent=0 // pred_check_branch
    %21 = sbr.rel (0) target = $region17
  $region16: #{filter_layer.1} parent=0 // pred_region
    _
  $region17: #{filter_layer.1} parent=0 // pred_fallthru
    _
  // Predicated region
  $region18: #{filter_layer.1} parent=0 // pred_check
    _
  $region19: #{filter_layer.1} parent=0 // pred_check_branch
    %23 = sbr.rel (0) target = $region21
  $region20: #{filter_layer.1} parent=0 // pred_region
    _
  $region21: #{filter_layer.1} parent=0 // pred_fallthru
    _
  // Predicated region
  $region22: #{filter_layer.1} parent=0 // pred_check
    _
  $region23: #{filter_layer.1} parent=0 // pred_check_branch
    %25 = sbr.rel (0) target = $region25
  $region24: #{filter_layer.1} parent=0 // pred_region
    _
  $region25: #{filter_layer.1} parent=0 // pred_fallthru
    _
  // Predicated region
  $region26: #{filter_layer.1} parent=0 // pred_check
    _
  $region27: #{filter_layer.1} parent=0 // pred_check_branch
    %27 = sbr.rel (0) target = $region29
  $region28: #{filter_layer.1} parent=0 // pred_region
    _
  $region29: #{filter_layer.1} parent=0 // pred_fallthru
    _
  // Predicated region
  $region30: #{filter_layer.1} parent=0 // pred_check
    _
  $region31: #{filter_layer.1} parent=0 // pred_check_branch
    %29 = sbr.rel (0) target = $region33
  $region32: #{filter_layer.1} parent=0 // pred_region
    _
  $region33: #{filter_layer.1} parent=0 // pred_fallthru
    _
  // Predicated region
  $region34: #{filter_layer.1} parent=0 // pred_check
    _
  $region35: #{filter_layer.1} parent=0 // pred_check_branch
    %31 = sbr.rel (0) target = $region37
  $region36: #{filter_layer.1} parent=0 // pred_region
    _
  $region37: #{filter_layer.1} parent=0 // pred_fallthru
    _
  %v32 = vld [vmem:[%s0] sm:$0xff]
  %v33 = vld [vmem:[%s0 + $0x8] sm:$0xff]
  %v34 = vld [vmem:[%s0 + $0x10] sm:$0xff]
  %v35 = vld [vmem:[%s0 + $0x18] sm:$0xff]
  %v36 = vld [vmem:[%s1] sm:$0xff]
  %v37 = vld [vmem:[%s1 + $0x8] sm:$0xff]
  %v38 = vld [vmem:[%s1 + $0x10] sm:$0xff]
  %v39 = vld [vmem:[%s1 + $0x18] sm:$0xff]
  %vm40 = vcmask 130048
  %v42 = vsel %vm40, %v36, 0
  %v45 = vsel %vm40, %v37, 0
  %v48 = vsel %vm40, %v38, 0
  %v51 = vsel %vm40, %v39, 0
  %53 = vmatprep.subr.mxu0 %v33
  %54 = vmatpush1.msra.mxu0 %v32
  %55 = vmatprep.subr.mxu0 %v35
  %56 = vmatpush1.msra.mxu0 %v34
  %57 = vmatprep.subr.mxu0 0.0
  %58 = vmatpush1.msra.mxu0 0.0
  %59 = vmatprep.subr.mxu0 0.0
  %60 = vmatpush1.msra.mxu0 0.0
  %61 = vmatprep.subr.mxu0 0.0
  %62 = vmatpush1.msra.mxu0 0.0
  %63 = vmatprep.subr.mxu0 0.0
  %64 = vmatpush1.msra.mxu0 0.0
  %65 = vmatprep.subr.mxu0 0.0
  %66 = vmatpush1.msra.mxu0 0.0
  %67 = vmatprep.subr.mxu0 0.0
  %68 = vmatpush1.msra.mxu0 0.0
  %69 = vmatprep.subr.mxu0 0.0
  %70 = vmatpush1.msra.mxu0 0.0
  %71 = vmatprep.subr.mxu0 0.0
  %72 = vmatpush1.msra.mxu0 0.0
  %73 = vmatprep.subr.mxu0 0.0
  %74 = vmatpush1.msra.mxu0 0.0
  %75 = vmatprep.subr.mxu0 0.0
  %76 = vmatpush1.msra.mxu0 0.0
  %77 = vmatprep.subr.mxu0 0.0
  %78 = vmatpush1.msra.mxu0 0.0
  %79 = vmatprep.subr.mxu0 0.0
  %80 = vmatpush1.msra.mxu0 0.0
  %81 = vmatprep.subr.mxu0 0.0
  %82 = vmatpush1.msra.mxu0 0.0
  %83 = vmatprep.subr.mxu0 0.0
  %84 = vmatpush1.msra.mxu0 0.0
  %85 = vmatprep.subr.mxu0 0.0
  %86 = vmatpush1.msra.mxu0 0.0
  %87 = vmatprep.subr.mxu0 0.0
  %88 = vmatpush1.msra.mxu0 0.0
  %89 = vmatprep.subr.mxu0 0.0
  %90 = vmatpush1.msra.mxu0 0.0
  %91 = vmatprep.subr.mxu0 0.0
  %92 = vmatpush1.msra.mxu0 0.0
  %93 = vmatprep.subr.mxu0 0.0
  %94 = vmatpush1.msra.mxu0 0.0
  %95 = vmatprep.subr.mxu0 0.0
  %96 = vmatpush1.msra.mxu0 0.0
  %97 = vmatprep.subr.mxu0 0.0
  %98 = vmatpush1.msra.mxu0 0.0
  %99 = vmatprep.subr.mxu0 0.0
  %100 = vmatpush1.msra.mxu0 0.0
  %101 = vmatprep.subr.mxu0 0.0
  %102 = vmatpush1.msra.mxu0 0.0
  %103 = vmatprep.subr.mxu0 0.0
  %104 = vmatpush1.msra.mxu0 0.0
  %105 = vmatprep.subr.mxu0 0.0
  %106 = vmatpush1.msra.mxu0 0.0
  %107 = vmatprep.subr.mxu0 0.0
  %108 = vmatpush1.msra.mxu0 0.0
  %109 = vmatprep.subr.mxu0 0.0
  %110 = vmatpush1.msra.mxu0 0.0
  %111 = vmatprep.subr.mxu0 0.0
  %112 = vmatpush1.msra.mxu0 0.0
  %113 = vmatprep.subr.mxu0 0.0
  %114 = vmatpush1.msra.mxu0 0.0
  %115 = vmatprep.subr.mxu0 0.0
  %116 = vmatpush1.msra.mxu0 0.0
  %117 = vmatprep.mubr.f32.mxu0 0.0
  %118 = vmatmul.mubr.f32.gmra.mrb[0].mxu0 %v42
  %v119 = vpop.f32.mrb[0].mxu0
  %v120 = vadd.f32 0.0, %v119
  %v121 = vpop.f32.mrb[0].mxu0
  %v122 = vadd.f32 0.0, %v121
  %123 = vmatprep.mubr.f32.mxu0 0.0
  %124 = vmatmul.mubr.f32.gmra.mrb[0].mxu0 %v45
  %v125 = vpop.f32.mrb[0].mxu0
  %v126 = vadd.f32 0.0, %v125
  %v127 = vpop.f32.mrb[0].mxu0
  %v128 = vadd.f32 0.0, %v127
  %129 = vmatprep.mubr.f32.mxu0 0.0
  %130 = vmatmul.mubr.f32.gmra.mrb[0].mxu0 %v48
  %v131 = vpop.f32.mrb[0].mxu0
  %v132 = vadd.f32 0.0, %v131
  %v133 = vpop.f32.mrb[0].mxu0
  %v134 = vadd.f32 0.0, %v133
  %135 = vmatprep.mubr.f32.mxu0 0.0
  %136 = vmatmul.mubr.f32.gmra.mrb[0].mxu0 %v51
  %v137 = vpop.f32.mrb[0].mxu0
  %v138 = vadd.f32 0.0, %v137
  %v139 = vpop.f32.mrb[0].mxu0
  %v140 = vadd.f32 0.0, %v139
  %141 = vdwg.mxu0
  %v142 = vld [vmem:[%s3] sm:$0xff]
  %v143 = vld [vmem:[%s3 + $0x8] sm:$0xff]
  %v144 = vld [vmem:[%s3 + $0x10] sm:$0xff]
  %v145 = vld [vmem:[%s3 + $0x18] sm:$0xff]
  %v146 = vld [vmem:[%s3 + $0x20] sm:$0xff]
  %v147 = vld [vmem:[%s3 + $0x28] sm:$0xff]
  %v148 = vld [vmem:[%s3 + $0x30] sm:$0xff]
  %v149 = vld [vmem:[%s3 + $0x38] sm:$0xff]
  %v150 = vmul.f32 %v120, %v142
  %v151 = vmul.f32 %v122, %v143
  %v152 = vmul.f32 %v126, %v144
  %v153 = vmul.f32 %v128, %v145
  %v154 = vmul.f32 %v132, %v146
  %v155 = vmul.f32 %v134, %v147
  %v156 = vmul.f32 %v138, %v148
  %v157 = vmul.f32 %v140, %v149
  %v158 = vld [vmem:[%s4] sm:$0xff]
  %v159 = vld [vmem:[%s4 + $0x8] sm:$0xff]
  %v160 = vld [vmem:[%s4 + $0x10] sm:$0xff]
  %v161 = vld [vmem:[%s4 + $0x18] sm:$0xff]
  %v162 = vld [vmem:[%s4 + $0x20] sm:$0xff]
  %v163 = vld [vmem:[%s4 + $0x28] sm:$0xff]
  %v164 = vld [vmem:[%s4 + $0x30] sm:$0xff]
  %v165 = vld [vmem:[%s4 + $0x38] sm:$0xff]
  %v166 = vmul.f32 %v132, %v158
  %v167 = vmul.f32 %v134, %v159
  %v168 = vmul.f32 %v138, %v160
  %v169 = vmul.f32 %v140, %v161
  %v170 = vmul.f32 %v120, %v162
  %v171 = vmul.f32 %v122, %v163
  %v172 = vmul.f32 %v126, %v164
  %v173 = vmul.f32 %v128, %v165
  %v174 = vadd.f32 %v150, %v166
  %v175 = vadd.f32 %v151, %v167
  %v176 = vadd.f32 %v152, %v168
  %v177 = vadd.f32 %v153, %v169
  %v178 = vadd.f32 %v154, %v170
  %v179 = vadd.f32 %v155, %v171
  %v180 = vadd.f32 %v156, %v172
  %v181 = vadd.f32 %v157, %v173
  %v182 = vld [vmem:[%s2] sm:$0xff]
  %v183 = vld [vmem:[%s2 + $0x8] sm:$0xff]
  %vm184 = vcmask 261120
  %v186 = vsel %vm184, %v182, 0
  %v189 = vsel %vm184, %v183, 0
  %191 = vmatprep.subr.mxu0 %v175
  %192 = vmatpush1.msra.mxu0 %v174
  %193 = vmatprep.subr.mxu0 %v177
  %194 = vmatpush1.msra.mxu0 %v176
  %195 = vmatprep.subr.mxu0 %v179
  %196 = vmatpush1.msra.mxu0 %v178
  %197 = vmatprep.subr.mxu0 %v181
  %198 = vmatpush1.msra.mxu0 %v180
  %199 = vmatprep.subr.mxu0 0.0
  %200 = vmatpush1.msra.mxu0 0.0
  %201 = vmatprep.subr.mxu0 0.0
  %202 = vmatpush1.msra.mxu0 0.0
  %203 = vmatprep.subr.mxu0 0.0
  %204 = vmatpush1.msra.mxu0 0.0
  %205 = vmatprep.subr.mxu0 0.0
  %206 = vmatpush1.msra.mxu0 0.0
  %207 = vmatprep.subr.mxu0 0.0
  %208 = vmatpush1.msra.mxu0 0.0
  %209 = vmatprep.subr.mxu0 0.0
  %210 = vmatpush1.msra.mxu0 0.0
  %211 = vmatprep.subr.mxu0 0.0
  %212 = vmatpush1.msra.mxu0 0.0
  %213 = vmatprep.subr.mxu0 0.0
  %214 = vmatpush1.msra.mxu0 0.0
  %215 = vmatprep.subr.mxu0 0.0
  %216 = vmatpush1.msra.mxu0 0.0
  %217 = vmatprep.subr.mxu0 0.0
  %218 = vmatpush1.msra.mxu0 0.0
  %219 = vmatprep.subr.mxu0 0.0
  %220 = vmatpush1.msra.mxu0 0.0
  %221 = vmatprep.subr.mxu0 0.0
  %222 = vmatpush1.msra.mxu0 0.0
  %223 = vmatprep.subr.mxu0 0.0
  %224 = vmatpush1.msra.mxu0 0.0
  %225 = vmatprep.subr.mxu0 0.0
  %226 = vmatpush1.msra.mxu0 0.0
  %227 = vmatprep.subr.mxu0 0.0
  %228 = vmatpush1.msra.mxu0 0.0
  %229 = vmatprep.subr.mxu0 0.0
  %230 = vmatpush1.msra.mxu0 0.0
  %231 = vmatprep.subr.mxu0 0.0
  %232 = vmatpush1.msra.mxu0 0.0
  %233 = vmatprep.subr.mxu0 0.0
  %234 = vmatpush1.msra.mxu0 0.0
  %235 = vmatprep.subr.mxu0 0.0
  %236 = vmatpush1.msra.mxu0 0.0
  %237 = vmatprep.subr.mxu0 0.0
  %238 = vmatpush1.msra.mxu0 0.0
  %239 = vmatprep.subr.mxu0 0.0
  %240 = vmatpush1.msra.mxu0 0.0
  %241 = vmatprep.subr.mxu0 0.0
  %242 = vmatpush1.msra.mxu0 0.0
  %243 = vmatprep.subr.mxu0 0.0
  %244 = vmatpush1.msra.mxu0 0.0
  %245 = vmatprep.subr.mxu0 0.0
  %246 = vmatpush1.msra.mxu0 0.0
  %247 = vmatprep.subr.mxu0 0.0
  %248 = vmatpush1.msra.mxu0 0.0
  %249 = vmatprep.subr.mxu0 0.0
  %250 = vmatpush1.msra.mxu0 0.0
  %251 = vmatprep.subr.mxu0 0.0
  %252 = vmatpush1.msra.mxu0 0.0
  %253 = vmatprep.subr.mxu0 0.0
  %254 = vmatpush1.msra.mxu0 0.0
  %255 = vmatprep.mubr.f32.mxu0 0.0
  %256 = vmatmul.mubr.f32.gmra.mrb[0].mxu0 %v186
  %v257 = vpop.f32.mrb[0].mxu0
  %v258 = vadd.f32 %v32, %v257
  %v259 = vpop.f32.mrb[0].mxu0
  %v260 = vadd.f32 %v33, %v259
  %261 = vmatprep.mubr.f32.mxu0 0.0
  %262 = vmatmul.mubr.f32.gmra.mrb[0].mxu0 %v189
  %v263 = vpop.f32.mrb[0].mxu0
  %v264 = vadd.f32 %v34, %v263
  %v265 = vpop.f32.mrb[0].mxu0
  %v266 = vadd.f32 %v35, %v265
  %267 = vdwg.mxu0
  %v268 = vmul.f32 %v258, %v258
  %v269 = vmul.f32 %v260, %v260
  %v270 = vmul.f32 %v264, %v264
  %v271 = vmul.f32 %v266, %v266
  %v272 = vld [vmem:[%s5] sm:$0xff]
  %v273 = vld [vmem:[%s5 + $0x8] sm:$0xff]
  %v274 = vld [vmem:[%s5 + $0x10] sm:$0xff]
  %v275 = vld [vmem:[%s5 + $0x18] sm:$0xff]
  %v276 = vld [vmem:[%s5 + $0x20] sm:$0xff]
  %v277 = vld [vmem:[%s5 + $0x28] sm:$0xff]
  %v278 = vld [vmem:[%s5 + $0x30] sm:$0xff]
  %v279 = vld [vmem:[%s5 + $0x38] sm:$0xff]
  %v280 = vld [vmem:[%s5 + $0x40] sm:$0xff]
  %v281 = vld [vmem:[%s5 + $0x48] sm:$0xff]
  %v282 = vld [vmem:[%s5 + $0x50] sm:$0xff]
  %v283 = vld [vmem:[%s5 + $0x58] sm:$0xff]
  %v284 = vld [vmem:[%s5 + $0x60] sm:$0xff]
  %v285 = vld [vmem:[%s5 + $0x68] sm:$0xff]
  %v286 = vld [vmem:[%s5 + $0x70] sm:$0xff]
  %v287 = vld [vmem:[%s5 + $0x78] sm:$0xff]
  %v288 = vld [vmem:[%s5 + $0x80] sm:$0xff]
  %v289 = vld [vmem:[%s5 + $0x88] sm:$0xff]
  %v290 = vld [vmem:[%s5 + $0x90] sm:$0xff]
  %v291 = vld [vmem:[%s5 + $0x98] sm:$0xff]
  %v292 = vld [vmem:[%s5 + $0xa0] sm:$0xff]
  %v293 = vld [vmem:[%s5 + $0xa8] sm:$0xff]
  %v294 = vld [vmem:[%s5 + $0xb0] sm:$0xff]
  %v295 = vld [vmem:[%s5 + $0xb8] sm:$0xff]
  %v296 = vld [vmem:[%s5 + $0xc0] sm:$0xff]
  %v297 = vld [vmem:[%s5 + $0xc8] sm:$0xff]
  %v298 = vld [vmem:[%s5 + $0xd0] sm:$0xff]
  %v299 = vld [vmem:[%s5 + $0xd8] sm:$0xff]
  %v300 = vld [vmem:[%s5 + $0xe0] sm:$0xff]
  %v301 = vld [vmem:[%s5 + $0xe8] sm:$0xff]
  %v302 = vld [vmem:[%s5 + $0xf0] sm:$0xff]
  %v303 = vld [vmem:[%s5 + $0xf8] sm:$0xff]
  %304 = vmatprep.subr.mxu0 0.0
  %305 = vmatpush1.msra.mxu0 %v272
  %306 = vmatprep.subr.mxu0 0.0
  %307 = vmatpush1.msra.mxu0 %v273
  %308 = vmatprep.subr.mxu0 0.0
  %309 = vmatpush1.msra.mxu0 %v274
  %310 = vmatprep.subr.mxu0 0.0
  %311 = vmatpush1.msra.mxu0 %v275
  %312 = vmatprep.subr.mxu0 0.0
  %313 = vmatpush1.msra.mxu0 %v276
  %314 = vmatprep.subr.mxu0 0.0
  %315 = vmatpush1.msra.mxu0 %v277
  %316 = vmatprep.subr.mxu0 0.0
  %317 = vmatpush1.msra.mxu0 %v278
  %318 = vmatprep.subr.mxu0 0.0
  %319 = vmatpush1.msra.mxu0 %v279
  %320 = vmatprep.subr.mxu0 0.0
  %321 = vmatpush1.msra.mxu0 %v280
  %322 = vmatprep.subr.mxu0 0.0
  %323 = vmatpush1.msra.mxu0 %v281
  %324 = vmatprep.subr.mxu0 0.0
  %325 = vmatpush1.msra.mxu0 %v282
  %326 = vmatprep.subr.mxu0 0.0
  %327 = vmatpush1.msra.mxu0 %v283
  %328 = vmatprep.subr.mxu0 0.0
  %329 = vmatpush1.msra.mxu0 %v284
  %330 = vmatprep.subr.mxu0 0.0
  %331 = vmatpush1.msra.mxu0 %v285
  %332 = vmatprep.subr.mxu0 0.0
  %333 = vmatpush1.msra.mxu0 %v286
  %334 = vmatprep.subr.mxu0 0.0
  %335 = vmatpush1.msra.mxu0 %v287
  %336 = vmatprep.subr.mxu0 0.0
  %337 = vmatpush1.msra.mxu0 %v288
  %338 = vmatprep.subr.mxu0 0.0
  %339 = vmatpush1.msra.mxu0 %v289
  %340 = vmatprep.subr.mxu0 0.0
  %341 = vmatpush1.msra.mxu0 %v290
  %342 = vmatprep.subr.mxu0 0.0
  %343 = vmatpush1.msra.mxu0 %v291
  %344 = vmatprep.subr.mxu0 0.0
  %345 = vmatpush1.msra.mxu0 %v292
  %346 = vmatprep.subr.mxu0 0.0
  %347 = vmatpush1.msra.mxu0 %v293
  %348 = vmatprep.subr.mxu0 0.0
  %349 = vmatpush1.msra.mxu0 %v294
  %350 = vmatprep.subr.mxu0 0.0
  %351 = vmatpush1.msra.mxu0 %v295
  %352 = vmatprep.subr.mxu0 0.0
  %353 = vmatpush1.msra.mxu0 %v296
  %354 = vmatprep.subr.mxu0 0.0
  %355 = vmatpush1.msra.mxu0 %v297
  %356 = vmatprep.subr.mxu0 0.0
  %357 = vmatpush1.msra.mxu0 %v298
  %358 = vmatprep.subr.mxu0 0.0
  %359 = vmatpush1.msra.mxu0 %v299
  %360 = vmatprep.subr.mxu0 0.0
  %361 = vmatpush1.msra.mxu0 %v300
  %362 = vmatprep.subr.mxu0 0.0
  %363 = vmatpush1.msra.mxu0 %v301
  %364 = vmatprep.subr.mxu0 0.0
  %365 = vmatpush1.msra.mxu0 %v302
  %366 = vmatprep.subr.mxu0 0.0
  %367 = vmatpush1.msra.mxu0 %v303
  %368 = vmatprep.mubr.f32.mxu0 %v260
  %369 = vmatmul.mubr.f32.gmra.mrb[0].mxu0 %v258
  %v370 = vpop.f32.mrb[0].mxu0
  %v371 = vadd.f32 0.0, %v370
  %v372 = vpop.f32.mrb[0].mxu0
  %373 = vmatprep.mubr.f32.mxu0 %v266
  %374 = vmatmul.mubr.f32.gmra.mrb[0].mxu0 %v264
  %v375 = vpop.f32.mrb[0].mxu0
  %v376 = vadd.f32 0.0, %v375
  %v377 = vpop.f32.mrb[0].mxu0
  %378 = vmatprep.mubr.f32.mxu0 %v269
  %379 = vmatmul.mubr.f32.gmra.mrb[0].mxu0 %v268
  %v380 = vpop.f32.mrb[0].mxu0
  %v381 = vadd.f32 0.0, %v380
  %v382 = vpop.f32.mrb[0].mxu0
  %383 = vmatprep.mubr.f32.mxu0 %v271
  %384 = vmatmul.mubr.f32.gmra.mrb[0].mxu0 %v270
  %v385 = vpop.f32.mrb[0].mxu0
  %v386 = vadd.f32 0.0, %v385
  %v387 = vpop.f32.mrb[0].mxu0
  %388 = vdwg.mxu0
  %v389 = vld [vmem:[%s6] sm:$0xff]
  %v390 = vld [vmem:[%s6 + $0x8] sm:$0xff]
  %vm391 = vcmask 64512
  %v393 = vsel %vm391, %v371, 0
  %v396 = vsel %vm391, %v376, 0
  %v399 = vsel %vm391, %v381, 0
  %v402 = vsel %vm391, %v386, 0
  %404 = vmatprep.subr.mxu0 %v390
  %405 = vmatpush1.msra.mxu0 %v389
  %406 = vmatprep.subr.mxu0 0.0
  %407 = vmatpush1.msra.mxu0 0.0
  %408 = vmatprep.subr.mxu0 0.0
  %409 = vmatpush1.msra.mxu0 0.0
  %410 = vmatprep.subr.mxu0 0.0
  %411 = vmatpush1.msra.mxu0 0.0
  %412 = vmatprep.subr.mxu0 0.0
  %413 = vmatpush1.msra.mxu0 0.0
  %414 = vmatprep.subr.mxu0 0.0
  %415 = vmatpush1.msra.mxu0 0.0
  %416 = vmatprep.subr.mxu0 0.0
  %417 = vmatpush1.msra.mxu0 0.0
  %418 = vmatprep.subr.mxu0 0.0
  %419 = vmatpush1.msra.mxu0 0.0
  %420 = vmatprep.subr.mxu0 0.0
  %421 = vmatpush1.msra.mxu0 0.0
  %422 = vmatprep.subr.mxu0 0.0
  %423 = vmatpush1.msra.mxu0 0.0
  %424 = vmatprep.subr.mxu0 0.0
  %425 = vmatpush1.msra.mxu0 0.0
  %426 = vmatprep.subr.mxu0 0.0
  %427 = vmatpush1.msra.mxu0 0.0
  %428 = vmatprep.subr.mxu0 0.0
  %429 = vmatpush1.msra.mxu0 0.0
  %430 = vmatprep.subr.mxu0 0.0
  %431 = vmatpush1.msra.mxu0 0.0
  %432 = vmatprep.subr.mxu0 0.0
  %433 = vmatpush1.msra.mxu0 0.0
  %434 = vmatprep.subr.mxu0 0.0
  %435 = vmatpush1.msra.mxu0 0.0
  %436 = vmatprep.subr.mxu0 0.0
  %437 = vmatpush1.msra.mxu0 0.0
  %438 = vmatprep.subr.mxu0 0.0
  %439 = vmatpush1.msra.mxu0 0.0
  %440 = vmatprep.subr.mxu0 0.0
  %441 = vmatpush1.msra.mxu0 0.0
  %442 = vmatprep.subr.mxu0 0.0
  %443 = vmatpush1.msra.mxu0 0.0
  %444 = vmatprep.subr.mxu0 0.0
  %445 = vmatpush1.msra.mxu0 0.0
  %446 = vmatprep.subr.mxu0 0.0
  %447 = vmatpush1.msra.mxu0 0.0
  %448 = vmatprep.subr.mxu0 0.0
  %449 = vmatpush1.msra.mxu0 0.0
  %450 = vmatprep.subr.mxu0 0.0
  %451 = vmatpush1.msra.mxu0 0.0
  %452 = vmatprep.subr.mxu0 0.0
  %453 = vmatpush1.msra.mxu0 0.0
  %454 = vmatprep.subr.mxu0 0.0
  %455 = vmatpush1.msra.mxu0 0.0
  %456 = vmatprep.subr.mxu0 0.0
  %457 = vmatpush1.msra.mxu0 0.0
  %458 = vmatprep.subr.mxu0 0.0
  %459 = vmatpush1.msra.mxu0 0.0
  %460 = vmatprep.subr.mxu0 0.0
  %461 = vmatpush1.msra.mxu0 0.0
  %462 = vmatprep.subr.mxu0 0.0
  %463 = vmatpush1.msra.mxu0 0.0
  %464 = vmatprep.subr.mxu0 0.0
  %465 = vmatpush1.msra.mxu0 0.0
  %466 = vmatprep.subr.mxu0 0.0
  %467 = vmatpush1.msra.mxu0 0.0
  %468 = vmatprep.mubr.f32.mxu0 0.0
  %469 = vmatmul.mubr.f32.gmra.mrb[0].mxu0 %v393
  %v470 = vpop.f32.mrb[0].mxu0
  %v471 = vadd.f32 0.0, %v470
  %v472 = vpop.f32.mrb[0].mxu0
  %v473 = vadd.f32 0.0, %v472
  %474 = vmatprep.mubr.f32.mxu0 0.0
  %475 = vmatmul.mubr.f32.gmra.mrb[0].mxu0 %v396
  %v476 = vpop.f32.mrb[0].mxu0
  %v477 = vadd.f32 0.0, %v476
  %v478 = vpop.f32.mrb[0].mxu0
  %v479 = vadd.f32 0.0, %v478
  %480 = vmatprep.mubr.f32.mxu0 0.0
  %481 = vmatmul.mubr.f32.gmra.mrb[0].mxu0 %v399
  %v482 = vpop.f32.mrb[0].mxu0
  %v483 = vadd.f32 0.0, %v482
  %v484 = vpop.f32.mrb[0].mxu0
  %v485 = vadd.f32 0.0, %v484
  %486 = vmatprep.mubr.f32.mxu0 0.0
  %487 = vmatmul.mubr.f32.gmra.mrb[0].mxu0 %v402
  %v488 = vpop.f32.mrb[0].mxu0
  %v489 = vadd.f32 0.0, %v488
  %v490 = vpop.f32.mrb[0].mxu0
  %v491 = vadd.f32 0.0, %v490
  %492 = vdwg.mxu0
  %v493 = vmul.f32 %v471, %v471
  %v494 = vmul.f32 %v473, %v473
  %v495 = vmul.f32 %v477, %v477
  %v496 = vmul.f32 %v479, %v479
  %v497 = vsub.f32 %v483, %v493
  %v498 = vsub.f32 %v485, %v494
  %v499 = vsub.f32 %v489, %v495
  %v500 = vsub.f32 %v491, %v496
  %v501 = vadd.f32 %v497, 1e-12
  %v502 = vadd.f32 %v498, 1e-12
  %v503 = vadd.f32 %v499, 1e-12
  %v504 = vadd.f32 %v500, 1e-12
  %v505 = vrsqrt.pop %v501
  %v506 = vrsqrt.pop %v502
  %v507 = vrsqrt.pop %v503
  %v508 = vrsqrt.pop %v504
  %v509 = vsub.f32 %v258, %v471
  %v510 = vsub.f32 %v260, %v473
  %v511 = vsub.f32 %v264, %v477
  %v512 = vsub.f32 %v266, %v479
  %v513 = vmul.f32 %v509, %v505
  %v514 = vmul.f32 %v510, %v506
  %v515 = vmul.f32 %v511, %v507
  %v516 = vmul.f32 %v512, %v508
  %v517 = vld [vmem:[%s7] sm:$0x3]
  %v519 = vlaneseq
  %v520 = vshrl.u32 %v519, 7
  %v521 = vsub.s32 0, %v520
  %v522 = vrot.slane %v517, %v521
  %v523 = vlaneseq
  %v524 = vshrl.u32 %v523, 7
  %v525 = vsub.s32 1, %v524
  %v526 = vrot.slane %v517, %v525
  %v529 = vmul.f32 %v513, %v522
  %v530 = vmul.f32 %v514, %v526
  %v531 = vmul.f32 %v515, %v522
  %v532 = vmul.f32 %v516, %v526
  %v533 = vld [vmem:[%s8] sm:$0x3]
  %v535 = vlaneseq
  %v536 = vshrl.u32 %v535, 7
  %v537 = vsub.s32 0, %v536
  %v538 = vrot.slane %v533, %v537
  %v539 = vlaneseq
  %v540 = vshrl.u32 %v539, 7
  %v541 = vsub.s32 1, %v540
  %v542 = vrot.slane %v533, %v541
  %v545 = vadd.f32 %v529, %v538
  %v546 = vadd.f32 %v530, %v542
  %v547 = vadd.f32 %v531, %v538
  %v548 = vadd.f32 %v532, %v542
  %549 = vst [vmem:[%s9] sm:$0xff] %v545
  %550 = vst [vmem:[%s9 + $0x8] sm:$0xff] %v546
  %551 = vst [vmem:[%s9 + $0x10] sm:$0xff] %v547
  %552 = vst [vmem:[%s9 + $0x18] sm:$0xff] %v548
  // Predicated region
  $region38: #{filter_layer.1} parent=0 // pred_check
    _
  $region39: #{filter_layer.1} parent=0 // pred_check_branch
    %554 = sbr.rel (0) target = $region41
  $region40: #{filter_layer.1} parent=0 // pred_region
    _
  $region41: #{filter_layer.1} parent=0 // pred_fallthru
    _
  // Predicated region
  $region42: #{filter_layer.1} parent=0 // pred_check
    _
  $region43: #{filter_layer.1} parent=0 // pred_check_branch
    %556 = sbr.rel (0) target = $region45
  $region44: #{filter_layer.1} parent=0 // pred_region
    _
  $region45: #{filter_layer.1} parent=0 // pred_fallthru
    _

</llo_original>
